<compile_context>
chip_gen: v5e
topology: v5e:2x2
jax: 0.10.0
libtpu: 0.0.40
codegen_flags: <defaults>
</compile_context>

<pallas_src>
import functools

import jax
import jax.numpy as jnp
from jax.experimental import pallas as pl
from jax.experimental.pallas import tpu as pltpu

HIDDEN_LAYER_SIZE = 30
LANE = 128
SUBLANE = 8
MAX_BATCH_TILE = 2048          # few, large tiles on single-TC chips (v5e/v6e)
SMALL_BATCH_SINGLE_TILE = 256  # below this, one grid point, no batch padding


def _round_up(x, m):
    return ((x + m - 1) // m) * m


def _mlp_kernel(x_ref, w1_ref, b1_ref, w2_ref, b2_ref, out_ref):
    # x_ref  : [TB, IN]          f32   (IN = true input_size, e.g. 5)
    # w1_ref : [IN, H_PAD]       f32   (hidden zero-padded to 128 lanes)
    # b1_ref : [1, H_PAD]        f32
    # w2_ref : [H_PAD, OUT_PAD]  f32   (rows AND cols zero-padded to 128)
    # b2_ref : [1, OUT_PAD]      f32
    # out_ref: [TB, OUT_PAD]     f32   (lane-dense store)
    #
    # Both contractions go to the MXU; bias add + ReLU ride the VPU.
    h = jnp.dot(x_ref[...], w1_ref[...], preferred_element_type=jnp.float32)
    h = jnp.maximum(h + b1_ref[...], 0.0)
    q = jnp.dot(h, w2_ref[...], preferred_element_type=jnp.float32)
    out_ref[...] = (q + b2_ref[...]).astype(out_ref.dtype)


def prepare_padded_params(w1, b1, w2, b2):
    """Pad weights/biases to lane-dense shapes ONCE, outside the per-call path.

    w1: [input_size, hidden], b1: [hidden], w2: [hidden, nb_action], b2: [nb_action]
    Returns (w1_p, b1_p, w2_p, b2_p) with hidden -> 128 and nb_action -> 128.
    w2 is zero-padded along its row (hidden) dim too, so fc2 is a clean
    [TB,128] @ [128,128]; the padded h lanes are exactly 0, so those rows
    contribute nothing to the output.
    """
    input_size, hidden = w1.shape
    nb_action = w2.shape[1]
    h_pad = _round_up(hidden, LANE)       # 30 -> 128
    out_pad = _round_up(nb_action, LANE)  # 3  -> 128
    w1_p = jnp.zeros((input_size, h_pad), jnp.float32).at[:, :hidden].set(w1)
    b1_p = jnp.zeros((1, h_pad), jnp.float32).at[0, :hidden].set(b1)
    w2_p = jnp.zeros((h_pad, out_pad), jnp.float32).at[:hidden, :nb_action].set(w2)
    b2_p = jnp.zeros((1, out_pad), jnp.float32).at[0, :nb_action].set(b2)
    return w1_p, b1_p, w2_p, b2_p


@functools.partial(jax.jit, static_argnames=("nb_action",))
def network_forward(state, w1_p, b1_p, w2_p, b2_p, *, nb_action):
    """state: [B, input_size] f32; padded params from prepare_padded_params.
       returns q_values: [B, nb_action] f32
    """
    B, input_size = state.shape
    out_pad = w2_p.shape[1]

    if B <= SMALL_BATCH_SINGLE_TILE:
        # Single grid point.  Block shapes equal the full (unpadded) array
        # dims, so no batch padding / extra HBM copy of `state` is needed.
        full = lambda arr: pl.BlockSpec(arr.shape, lambda: (0,) * arr.ndim)
        q_pad = pl.pallas_call(
            _mlp_kernel,
            out_shape=jax.ShapeDtypeStruct((B, out_pad), jnp.float32),
            grid=(),
            in_specs=[full(state), full(w1_p), full(b1_p), full(w2_p), full(b2_p)],
            out_specs=pl.BlockSpec((B, out_pad), lambda: (0, 0)),
        )(state, w1_p, b1_p, w2_p, b2_p)
        # TODO(synk): fuse the downstream DQN target/loss into this pallas_call
        # so the lane-padded q never round-trips through HBM.
        return q_pad[:, :nb_action]

    # Replay-sized batches: batch-tiled grid.  Guarantee >=2 grid steps so
    # v7x's two TensorCores both get work; cap the tile so single-TC chips
    # still use few, large tiles.  VMEM is nowhere near a constraint
    # (per-tile footprint well under 4 MiB even at TB=2048).
    tb = min(MAX_BATCH_TILE, _round_up(pl.cdiv(B, 2), SUBLANE))
    b_pad = _round_up(B, tb)
    num_tiles = b_pad // tb
    # Tiny pad of the ragged batch tail only (rows are independent; the
    # zero rows compute b2 + relu(b1)@w2 and are sliced off below).
    x_in = state if b_pad == B else (
        jnp.zeros((b_pad, input_size), jnp.float32).at[:B, :].set(state))

    # Weights/biases use constant index_maps -> stay VMEM-resident across
    # tiles; only the activations stream.
    const = lambda arr: pl.BlockSpec(arr.shape, lambda i: (0,) * arr.ndim)
    q_pad = pl.pallas_call(
        _mlp_kernel,
        out_shape=jax.ShapeDtypeStruct((b_pad, out_pad), jnp.float32),
        grid=(num_tiles,),
        in_specs=[pl.BlockSpec((tb, input_size), lambda i: (i, 0)),
                  const(w1_p), const(b1_p), const(w2_p), const(b2_p)],
        out_specs=pl.BlockSpec((tb, out_pad), lambda i: (i, 0)),
        compiler_params=pltpu.CompilerParams(
            dimension_semantics=("parallel",)),
    )(x_in, w1_p, b1_p, w2_p, b2_p)
    return q_pad[:B, :nb_action]


def init_params(key, input_size, nb_action):
    """Deterministic init mimicking nn.Linear's U(-1/sqrt(fan_in), 1/sqrt(fan_in))."""
    k1, k2, k3, k4 = jax.random.split(key, 4)
    bound1 = 1.0 / jnp.sqrt(jnp.float32(input_size))
    bound2 = 1.0 / jnp.sqrt(jnp.float32(HIDDEN_LAYER_SIZE))
    # Stored directly in [in, out] layout (transpose of PyTorch's [out, in]).
    w1 = jax.random.uniform(k1, (input_size, HIDDEN_LAYER_SIZE), jnp.float32,
                            -bound1, bound1)
    b1 = jax.random.uniform(k2, (HIDDEN_LAYER_SIZE,), jnp.float32,
                            -bound1, bound1)
    w2 = jax.random.uniform(k3, (HIDDEN_LAYER_SIZE, nb_action), jnp.float32,
                            -bound2, bound2)
    b2 = jax.random.uniform(k4, (nb_action,), jnp.float32, -bound2, bound2)
    return w1, b1, w2, b2


if __name__ == "__main__":
    # Typical self-driving-car agent: 5 sensor inputs, 3 actions.
    input_size = 5
    nb_action = 3
    batch = 4

    key = jax.random.PRNGKey(0)
    k_params, k_state, k_big = jax.random.split(key, 3)
    w1, b1, w2, b2 = init_params(k_params, input_size, nb_action)

    # Pad weights exactly once (hoisted out of the forward path).
    w1_p, b1_p, w2_p, b2_p = jax.block_until_ready(
        prepare_padded_params(w1, b1, w2, b2))

    hi = jax.lax.Precision.HIGHEST

    # Small-batch (single-tile, no batch padding) path.
    state = jax.random.normal(k_state, (batch, input_size), jnp.float32)
    q_values = network_forward(state, w1_p, b1_p, w2_p, b2_p,
                               nb_action=nb_action)
    jax.block_until_ready(q_values)

    h_ref = jnp.maximum(jnp.dot(state, w1, precision=hi) + b1, 0.0)
    q_ref = jnp.dot(h_ref, w2, precision=hi) + b2
    assert q_values.shape == (batch, nb_action)
    assert jnp.allclose(q_values, q_ref, atol=1e-4, rtol=1e-4), \
        "mismatch vs reference (small batch)"

    # Replay-batch sized input exercises the batch-tiled "parallel" grid path
    # (2 tiles of 504 rows for B=1000).
    big_state = jax.random.normal(k_big, (1000, input_size), jnp.float32)
    q_big = network_forward(big_state, w1_p, b1_p, w2_p, b2_p,
                            nb_action=nb_action)
    jax.block_until_ready(q_big)

    h_big = jnp.maximum(jnp.dot(big_state, w1, precision=hi) + b1, 0.0)
    q_big_ref = jnp.dot(h_big, w2, precision=hi) + b2
    assert q_big.shape == (1000, nb_action)
    assert jnp.allclose(q_big, q_big_ref, atol=1e-4, rtol=1e-4), \
        "mismatch vs reference (large batch)"

    print("KERNEL_OK")
</pallas_src>

<mosaic_0001>
module attributes {stable_mosaic.version = 11 : i64} {
  func.func @_mlp_kernel(%arg0: memref<4x5xf32, #tpu.memory_space<vmem>>, %arg1: memref<5x128xf32, #tpu.memory_space<vmem>>, %arg2: memref<1x128xf32, #tpu.memory_space<vmem>>, %arg3: memref<128x128xf32, #tpu.memory_space<vmem>>, %arg4: memref<1x128xf32, #tpu.memory_space<vmem>>, %arg5: memref<4x128xf32, #tpu.memory_space<vmem>>) attributes {dimension_semantics = [], scalar_prefetch = 0 : i64, scratch_operands = 0 : i64, tpu.core_type = #tpu.core_type<tc>} {
    %c0 = arith.constant 0 : index
    %c0_0 = arith.constant 0 : index
    %0 = vector.load %arg0[%c0, %c0_0] : memref<4x5xf32, #tpu.memory_space<vmem>>, vector<4x5xf32>
    %c0_1 = arith.constant 0 : index
    %c0_2 = arith.constant 0 : index
    %1 = vector.load %arg1[%c0_1, %c0_2] : memref<5x128xf32, #tpu.memory_space<vmem>>, vector<5x128xf32>
    %cst = arith.constant dense<0.000000e+00> : vector<4x128xf32>
    %2 = tpu.matmul %0, %1, %cst {dimension_numbers = #tpu.dot_dimension_numbers<[1], [0], [0], [1], [0, 0, 1, 1], [], []>} : vector<4x5xf32>, vector<5x128xf32>, vector<4x128xf32> -> vector<4x128xf32>
    %c0_3 = arith.constant 0 : index
    %c0_4 = arith.constant 0 : index
    %3 = vector.load %arg2[%c0_3, %c0_4] : memref<1x128xf32, #tpu.memory_space<vmem>>, vector<1x128xf32>
    %4 = vector.broadcast %3 : vector<1x128xf32> to vector<4x128xf32>
    %5 = arith.addf %2, %4 : vector<4x128xf32>
    %cst_5 = arith.constant 0.000000e+00 : f32
    %6 = vector.broadcast %cst_5 : f32 to vector<4x128xf32>
    %7 = arith.maximumf %5, %6 : vector<4x128xf32>
    %c0_6 = arith.constant 0 : index
    %c0_7 = arith.constant 0 : index
    %8 = vector.load %arg3[%c0_6, %c0_7] : memref<128x128xf32, #tpu.memory_space<vmem>>, vector<128x128xf32>
    %cst_8 = arith.constant dense<0.000000e+00> : vector<4x128xf32>
    %9 = tpu.matmul %7, %8, %cst_8 {dimension_numbers = #tpu.dot_dimension_numbers<[1], [0], [0], [1], [0, 0, 1, 1], [], []>} : vector<4x128xf32>, vector<128x128xf32>, vector<4x128xf32> -> vector<4x128xf32>
    %c0_9 = arith.constant 0 : index
    %c0_10 = arith.constant 0 : index
    %10 = vector.load %arg4[%c0_9, %c0_10] : memref<1x128xf32, #tpu.memory_space<vmem>>, vector<1x128xf32>
    %11 = vector.broadcast %10 : vector<1x128xf32> to vector<4x128xf32>
    %12 = arith.addf %9, %11 : vector<4x128xf32>
    %c0_11 = arith.constant 0 : index
    %c0_12 = arith.constant 0 : index
    %13 = vector.load %arg5[%c0_11, %c0_12] : memref<4x128xf32, #tpu.memory_space<vmem>>, vector<4x128xf32>
    tpu.vector_store %arg5[%c0_11, %c0_12], %12 {strides = array<i32>} : memref<4x128xf32, #tpu.memory_space<vmem>>, vector<4x128xf32>,
    return
  }
}

</mosaic_0001>

<llo_original>
// kernel: network_forward.1
$region0: #{network_forward.1}
  #allocation0 [shape = 'u32[]', space=smem, size = 0x4, offset = 0x4, fixed_abs, tag = 'smem constant byte address 0x4 - core index']
  #allocation1 [shape = 'u32[72,128]{1,0:T(1,128)}', space=vmem, size = 0x9000, scoped, tag = 'internal scratch']
  %s0 = inlined_call_operand.hbm [shape: f32[4,5], index: 0, kind: input, shape index: {}]
  %s1 = inlined_call_operand.hbm [shape: f32[5,128], index: 1, kind: input, shape index: {}]
  %s2 = inlined_call_operand.vmem [shape: f32[1,128], index: 2, kind: input, shape index: {}]
  %s3 = inlined_call_operand.hbm [shape: f32[128,128], index: 3, kind: input, shape index: {}]
  %s4 = inlined_call_operand.vmem [shape: f32[1,128], index: 4, kind: input, shape index: {}]
  %s5 = inlined_call_operand.hbm [shape: f32[4,128], index: 5, kind: output, shape index: {}]
  %s6 = sld [smem:[#allocation0]]
  $region42: #{network_forward.1} parent=0
    _
  %s8 = ssub.s32 1, %s6
  %s9 = scalar_select 0, %s8, %s6
  $region1: #{network_forward.1} parent=0
    #allocation2 [shape = 'u8[2048]{0}', space=vmem, size = 0x800, scoped, tag = 'input window, operand 0, single buffered']
    #allocation3 [shape = 's32[1]{0}', space=sflag, size = 0x4, scoped, tag = 'scoped memory for network_forward.1']
    #allocation4 [shape = 's32[1]{0}', space=sflag, size = 0x4, scoped, tag = 'scoped memory for network_forward.1']
    #allocation5 [shape = 'u8[4096]{0}', space=vmem, size = 0x1000, scoped, tag = 'input window, operand 1, single buffered']
    #allocation6 [shape = 's32[1]{0}', space=sflag, size = 0x4, scoped, tag = 'scoped memory for network_forward.1']
    #allocation7 [shape = 'u8[65536]{0}', space=vmem, size = 0x10000, scoped, tag = 'input window, operand 3, single buffered']
    #allocation8 [shape = 'u8[2048]{0}', space=vmem, size = 0x800, scoped, tag = 'output window, operand 0, single buffered']
    %10 = vsyncpa [#allocation3], 0
    %11 = vsyncpa [#allocation6], 0
    %12 = vsyncpa [#allocation4], 0
    // Predicated region
    $region2: #{network_forward.1} parent=1 // pred_check
      _
    $region3: #{network_forward.1} parent=1 // pred_check_branch
      %14 = sbr.rel (0) target = $region5
    $region4: #{network_forward.1} parent=1 // pred_region
      %16 = vsyncadd [#allocation3], 0
      %s18 = sshll.u32 %s0, 4
      %s19 = int_to_ptr.hbm [resolvable:$true] %s18
      %s20 = sshll.u32 [#allocation2], 4
      %s21 = int_to_ptr.vmem [resolvable:$true] %s20
      %23 = dma.hbm_to_vmem [thread:$0]  %s19, 64, %s21, [#allocation3]
    $region5: #{network_forward.1} parent=1 // pred_fallthru
      _
    // Predicated region
    $region6: #{network_forward.1} parent=1 // pred_check
      _
    $region7: #{network_forward.1} parent=1 // pred_check_branch
      %25 = sbr.rel (0) target = $region9
    $region8: #{network_forward.1} parent=1 // pred_region
      %27 = vsyncadd [#allocation6], 0
      %s29 = sshll.u32 %s1, 4
      %s30 = int_to_ptr.hbm [resolvable:$true] %s29
      %s31 = sshll.u32 [#allocation5], 4
      %s32 = int_to_ptr.vmem [resolvable:$true] %s31
      %34 = dma.hbm_to_vmem [thread:$0]  %s30, 128, %s32, [#allocation6]
    $region9: #{network_forward.1} parent=1 // pred_fallthru
      _
    // Predicated region
    $region10: #{network_forward.1} parent=1 // pred_check
      _
    $region11: #{network_forward.1} parent=1 // pred_check_branch
      %36 = sbr.rel (0) target = $region13
    $region12: #{network_forward.1} parent=1 // pred_region
      _
    $region13: #{network_forward.1} parent=1 // pred_fallthru
      _
    // Predicated region
    $region14: #{network_forward.1} parent=1 // pred_check
      _
    $region15: #{network_forward.1} parent=1 // pred_check_branch
      %38 = sbr.rel (0) target = $region17
    $region16: #{network_forward.1} parent=1 // pred_region
      %40 = vsyncadd [#allocation6], 0
      %s41 = sshll.u32 %s3, 4
      %s42 = int_to_ptr.hbm [resolvable:$true] %s41
      %s43 = sshll.u32 [#allocation7], 4
      %s44 = int_to_ptr.vmem [resolvable:$true] %s43
      %49 = dma.hbm_to_vmem [thread:$0]  %s42, 2048, %s44, [#allocation6], 128, 128, 8
    $region17: #{network_forward.1} parent=1 // pred_fallthru
      _
    // Predicated region
    $region18: #{network_forward.1} parent=1 // pred_check
      _
    $region19: #{network_forward.1} parent=1 // pred_check_branch
      %51 = sbr.rel (0) target = $region21
    $region20: #{network_forward.1} parent=1 // pred_region
      _
    $region21: #{network_forward.1} parent=1 // pred_fallthru
      _
    // Predicated region
    $region22: #{network_forward.1} parent=1 // pred_check
      _
    $region23: #{network_forward.1} parent=1 // pred_check_branch
      %53 = sbr.rel (0) target = $region25
    $region24: #{network_forward.1} parent=1 // pred_region
      %55 = dma.done [#allocation3], 64
    $region25: #{network_forward.1} parent=1 // pred_fallthru
      _
    // Predicated region
    $region26: #{network_forward.1} parent=1 // pred_check
      _
    $region27: #{network_forward.1} parent=1 // pred_check_branch
      %57 = sbr.rel (0) target = $region29
    $region28: #{network_forward.1} parent=1 // pred_region
      %59 = dma.done [#allocation6], 128
    $region29: #{network_forward.1} parent=1 // pred_fallthru
      _
    // Predicated region
    $region30: #{network_forward.1} parent=1 // pred_check
      _
    $region31: #{network_forward.1} parent=1 // pred_check_branch
      %61 = sbr.rel (0) target = $region33
    $region32: #{network_forward.1} parent=1 // pred_region
      %63 = dma.done [#allocation6], 2048
    $region33: #{network_forward.1} parent=1 // pred_fallthru
      _
    %v64 = vld [vmem:[#allocation2] sm:$0xf]
    %v65 = vld [vmem:[#allocation5] sm:$0x1f]
    %v66 = vld [vmem:[%s2] sm:$0x1]
    %v68 = vperm.slane %v66, 0
    %vm70 = vcmask 39936
    %v72 = vsel %vm70, %v64, 0
    %vm74 = vcmask 1044480
    %v76 = vsel %vm74, %v65, 0
    %78 = vmatpush.msra.mxu0 0.0
    %79 = vmatpush.msra.mxu0 0.0
    %80 = vmatpush.msra.mxu0 0.0
    %81 = vmatpush.msra.mxu0 0.0
    %82 = vmatpush.msra.mxu0 0.0
    %83 = vmatpush.msra.mxu0 0.0
    %84 = vmatpush.msra.mxu0 0.0
    %85 = vmatpush.msra.mxu0 0.0
    %86 = vmatpush.msra.mxu0 0.0
    %87 = vmatpush.msra.mxu0 0.0
    %88 = vmatpush.msra.mxu0 0.0
    %89 = vmatpush.msra.mxu0 0.0
    %90 = vmatpush.msra.mxu0 0.0
    %91 = vmatpush.msra.mxu0 0.0
    %92 = vmatpush.msra.mxu0 0.0
    %93 = vmatpush.msra.mxu0 %v76
    %94 = vmatmul.f32.gmra.mxu0 %v72
    %v95 = vpop.f32.mrf.mxu0
    %v96 = vadd.f32 %v68, %v95
    %97 = vdwg.mxu0
    %v98 = vmax.f32 %v96, 0.0
    %v99 = vld [vmem:[#allocation7] sm:$0xff]
    %v100 = vld [vmem:[#allocation7 + $0x8] sm:$0xff]
    %v101 = vld [vmem:[#allocation7 + $0x10] sm:$0xff]
    %v102 = vld [vmem:[#allocation7 + $0x18] sm:$0xff]
    %v103 = vld [vmem:[#allocation7 + $0x20] sm:$0xff]
    %v104 = vld [vmem:[#allocation7 + $0x28] sm:$0xff]
    %v105 = vld [vmem:[#allocation7 + $0x30] sm:$0xff]
    %v106 = vld [vmem:[#allocation7 + $0x38] sm:$0xff]
    %v107 = vld [vmem:[#allocation7 + $0x40] sm:$0xff]
    %v108 = vld [vmem:[#allocation7 + $0x48] sm:$0xff]
    %v109 = vld [vmem:[#allocation7 + $0x50] sm:$0xff]
    %v110 = vld [vmem:[#allocation7 + $0x58] sm:$0xff]
    %v111 = vld [vmem:[#allocation7 + $0x60] sm:$0xff]
    %v112 = vld [vmem:[#allocation7 + $0x68] sm:$0xff]
    %v113 = vld [vmem:[#allocation7 + $0x70] sm:$0xff]
    %v114 = vld [vmem:[#allocation7 + $0x78] sm:$0xff]
    %v115 = vld [vmem:[%s4] sm:$0x1]
    %v117 = vperm.slane %v115, 0
    %119 = vmatpush.msra.mxu0 %v114
    %120 = vmatpush.msra.mxu0 %v113
    %121 = vmatpush.msra.mxu0 %v112
    %122 = vmatpush.msra.mxu0 %v111
    %123 = vmatpush.msra.mxu0 %v110
    %124 = vmatpush.msra.mxu0 %v109
    %125 = vmatpush.msra.mxu0 %v108
    %126 = vmatpush.msra.mxu0 %v107
    %127 = vmatpush.msra.mxu0 %v106
    %128 = vmatpush.msra.mxu0 %v105
    %129 = vmatpush.msra.mxu0 %v104
    %130 = vmatpush.msra.mxu0 %v103
    %131 = vmatpush.msra.mxu0 %v102
    %132 = vmatpush.msra.mxu0 %v101
    %133 = vmatpush.msra.mxu0 %v100
    %134 = vmatpush.msra.mxu0 %v99
    %135 = vmatmul.f32.gmra.mxu0 %v98
    %v136 = vpop.f32.mrf.mxu0
    %v137 = vadd.f32 %v117, %v136
    %138 = vdwg.mxu0
    %139 = vst [vmem:[#allocation8] sm:$0xf] %v137
    // Predicated region
    $region34: #{network_forward.1} parent=1 // pred_check
      _
    $region35: #{network_forward.1} parent=1 // pred_check_branch
      %141 = sbr.rel (0) target = $region37
    $region36: #{network_forward.1} parent=1 // pred_region
      %143 = vsyncadd [#allocation4], 0
      %s145 = sshll.u32 [#allocation8], 4
      %s146 = int_to_ptr.vmem [resolvable:$true] %s145
      %s147 = sshll.u32 %s5, 4
      %s148 = int_to_ptr.hbm [resolvable:$true] %s147
      %150 = dma.vmem_to_hbm [thread:$0]  %s146, 64, %s148, [#allocation4]
    $region37: #{network_forward.1} parent=1 // pred_fallthru
      _
    // Predicated region
    $region38: #{network_forward.1} parent=1 // pred_check
      _
    $region39: #{network_forward.1} parent=1 // pred_check_branch
      %152 = sbr.rel (0) target = $region41
    $region40: #{network_forward.1} parent=1 // pred_region
      %154 = dma.done [#allocation4], 64
    $region41: #{network_forward.1} parent=1 // pred_fallthru
      _
    %155 = vsyncpa [#allocation3], 1
    %156 = vsyncpa [#allocation6], 1
    %157 = vsyncpa [#allocation4], 1

</llo_original>
